<compile_context>
chip_gen: v6e
topology: v6e:2x2x1
jax: 0.10.0
libtpu: 0.0.40
codegen_flags: <defaults>
</compile_context>

<pallas_src>
import jax
import jax.numpy as jnp
from jax.experimental import pallas as pl
from jax.experimental.pallas import tpu as pltpu


def _gather_rows_kernel(idx_ref, table_hbm, out_ref, row_buf, sem):
    """Gather one (TILE_ROWS, E) block of embedding rows from HBM.

    idx_ref:   (N_pad,) int32 in SMEM (scalar prefetch) — flattened row ids.
    table_hbm: (V, E) ref left in HBM (memory_space=pl.ANY).
    out_ref:   (TILE_ROWS, E) VMEM output block for this grid step.
    row_buf:   (TILE_ROWS, E) VMEM scratch landing zone for the row DMAs.
    sem:       single DMA semaphore shared by all row copies (equal sizes).
    """
    tile_rows = out_ref.shape[0]
    base = pl.program_id(0) * tile_rows

    # Issue all row DMAs back-to-back so they overlap in the DMA engine.
    @pl.loop(0, tile_rows)
    def _start(r):
        row = idx_ref[base + r]
        pltpu.make_async_copy(
            table_hbm.at[pl.ds(row, 1), :],
            row_buf.at[pl.ds(r, 1), :],
            sem,
        ).start()

    # Drain: every copy moved the same number of bytes, so waiting once per
    # issued copy (in any order) is exact.
    @pl.loop(0, tile_rows)
    def _wait(r):
        pltpu.make_async_copy(
            table_hbm.at[pl.ds(0, 1), :],
            row_buf.at[pl.ds(r, 1), :],
            sem,
        ).wait()

    out_ref[...] = row_buf[...]


def _round_up(x, m):
    return (x + m - 1) // m * m


def var_embedding_forward(data, table, tile_rows=128):
    """data: (B, S, 1) integer indices; table: (V, E) float table -> (B, S, E)."""
    idx = jnp.squeeze(data, axis=2).astype(jnp.int32)   # torch .squeeze(dim=2)
    B, S = idx.shape
    V, E = table.shape
    n = B * S

    # Flatten (view(-1)) and clamp: DMA has no OOB check on TPU refs.
    # TODO(synk): PyTorch raises on out-of-range indices; here they are
    # clamped to [0, V-1] instead of raising.
    flat = jnp.clip(idx.reshape(n), 0, V - 1)

    # Coarse, lane-dense output tiles: rows a multiple of 8 (f32 sublane), up
    # to `tile_rows` (>=128 preferred), or all of B*S when the problem is tiny.
    tr = min(tile_rows, _round_up(n, 8))
    n_pad = _round_up(n, tr)
    if n_pad != n:
        flat = jnp.concatenate([flat, jnp.zeros((n_pad - n,), dtype=jnp.int32)])

    grid_spec = pltpu.PrefetchScalarGridSpec(
        num_scalar_prefetch=1,                        # flat indices -> SMEM
        grid=(n_pad // tr,),
        in_specs=[pl.BlockSpec(memory_space=pl.ANY)],  # table stays in HBM
        out_specs=pl.BlockSpec((tr, E), lambda t, idx: (t, 0)),
        scratch_shapes=[
            pltpu.VMEM((tr, E), table.dtype),
            pltpu.SemaphoreType.DMA(()),
        ],
    )

    out_flat = pl.pallas_call(
        _gather_rows_kernel,
        out_shape=jax.ShapeDtypeStruct((n_pad, E), table.dtype),
        grid_spec=grid_spec,
        compiler_params=pltpu.CompilerParams(
            dimension_semantics=("parallel",),         # row tiles shard across TCs
        ),
        cost_estimate=pl.CostEstimate(
            flops=0,
            transcendentals=0,
            bytes_accessed=2 * n_pad * E * table.dtype.itemsize + n_pad * 4,
        ),
    )(flat, table)

    return out_flat[:n].reshape(B, S, E)


if __name__ == "__main__":
    B, S = 2, 8          # batch, sequence length
    V, E = 64, 128       # vocab size, tgt_word_vec_size (embedding size)

    key = jax.random.PRNGKey(0)
    k_tbl, k_idx = jax.random.split(key)

    # Deterministic synthetic word_representer() output: (V, E) table.
    table = jax.random.normal(k_tbl, (V, E), dtype=jnp.float32)
    # Input indices shaped (B, S, 1) as the PyTorch module expects.
    data = jax.random.randint(k_idx, (B, S, 1), 0, V, dtype=jnp.int32)

    out = var_embedding_forward(data, table)
    out = jax.block_until_ready(out)

    # Pure-JAX reference: var[data.squeeze(-1)].  The kernel is a pure copy,
    # so the result must be bit-identical.
    ref = table[jnp.squeeze(data, axis=2)]
    assert out.shape == (B, S, E)
    assert bool(jnp.array_equal(out, ref))

    print("KERNEL_OK")
</pallas_src>

<mosaic_0001>
module attributes {stable_mosaic.version = 11 : i64} {
  func.func @_gather_rows_kernel(%arg0: i32, %arg1: memref<16xi32, #tpu.memory_space<smem>>, %arg2: memref<64x128xf32, #tpu.memory_space<any>>, %arg3: memref<16x128xf32, #tpu.memory_space<vmem>>, %arg4: memref<16x128xf32, #tpu.memory_space<vmem>>, %arg5: memref<!tpu.dma_semaphore, #tpu.memory_space<semaphore_mem>>) attributes {dimension_semantics = [#tpu.dimension_semantics<parallel>], iteration_bounds = array<i64: 1>, scalar_prefetch = 1 : i64, scratch_operands = 2 : i64, tpu.core_type = #tpu.core_type<tc>, window_params = [{}, {transform_indices = @transform_1, window_bounds = array<i64: 16, 128>}]} {
    %c16_i32 = arith.constant 16 : i32
    %0 = arith.muli %arg0, %c16_i32 : i32
    %c0_i32 = arith.constant 0 : i32
    %c16_i32_0 = arith.constant 16 : i32
    %1 = arith.addi %c0_i32, %c16_i32_0 : i32
    %c1_i32 = arith.constant 1 : i32
    scf.for %arg6 = %c0_i32 to %1 step %c1_i32  : i32 {
      %c1_i32_9 = arith.constant 1 : i32
      %5 = arith.muli %arg6, %c1_i32_9 : i32
      %c0_i32_10 = arith.constant 0 : i32
      %6 = arith.addi %c0_i32_10, %5 : i32
      %7 = arith.addi %0, %6 : i32
      %8 = arith.index_cast %7 : i32 to index
      %9 = memref.load %arg1[%8] : memref<16xi32, #tpu.memory_space<smem>>
      %c0_i32_11 = arith.constant 0 : i32
      %10 = tpu.memref_slice %arg2[%9, %c0_i32_11] : memref<64x128xf32, #tpu.memory_space<any>> -> memref<1x128xf32, #tpu.memory_space<any>>
      %c0_i32_12 = arith.constant 0 : i32
      %11 = tpu.memref_slice %arg4[%6, %c0_i32_12] : memref<16x128xf32, #tpu.memory_space<vmem>> -> memref<1x128xf32, #tpu.memory_space<vmem>>
      tpu.enqueue_dma source(%10 : memref<1x128xf32, #tpu.memory_space<any>>) target(%11 : memref<1x128xf32, #tpu.memory_space<vmem>>) target_semaphore(%arg5 : memref<!tpu.dma_semaphore, #tpu.memory_space<semaphore_mem>>)
    }
    %c16_i32_1 = arith.constant 16 : i32
    %c0_i32_2 = arith.constant 0 : i32
    %c16_i32_3 = arith.constant 16 : i32
    %2 = arith.addi %c0_i32_2, %c16_i32_3 : i32
    %c1_i32_4 = arith.constant 1 : i32
    scf.for %arg6 = %c0_i32_2 to %2 step %c1_i32_4  : i32 {
      %c1_i32_9 = arith.constant 1 : i32
      %5 = arith.muli %arg6, %c1_i32_9 : i32
      %c0_i32_10 = arith.constant 0 : i32
      %6 = arith.addi %c0_i32_10, %5 : i32
      %c0_i32_11 = arith.constant 0 : i32
      %c0_i32_12 = arith.constant 0 : i32
      %7 = tpu.memref_slice %arg2[%c0_i32_11, %c0_i32_12] : memref<64x128xf32, #tpu.memory_space<any>> -> memref<1x128xf32, #tpu.memory_space<any>>
      %c0_i32_13 = arith.constant 0 : i32
      %8 = tpu.memref_slice %arg4[%6, %c0_i32_13] : memref<16x128xf32, #tpu.memory_space<vmem>> -> memref<1x128xf32, #tpu.memory_space<vmem>>
      tpu.wait_dma2 semaphore(%arg5 : memref<!tpu.dma_semaphore, #tpu.memory_space<semaphore_mem>>) src(%7 : memref<1x128xf32, #tpu.memory_space<any>>) dst(%8 : memref<1x128xf32, #tpu.memory_space<vmem>>)
    }
    %c16_i32_5 = arith.constant 16 : i32
    %c0 = arith.constant 0 : index
    %c0_6 = arith.constant 0 : index
    %3 = vector.load %arg4[%c0, %c0_6] : memref<16x128xf32, #tpu.memory_space<vmem>>, vector<16x128xf32>
    %c0_7 = arith.constant 0 : index
    %c0_8 = arith.constant 0 : index
    %4 = vector.load %arg3[%c0_7, %c0_8] : memref<16x128xf32, #tpu.memory_space<vmem>>, vector<16x128xf32>
    tpu.vector_store %arg3[%c0_7, %c0_8], %3 {strides = array<i32>} : memref<16x128xf32, #tpu.memory_space<vmem>>, vector<16x128xf32>,
    return
  }
  func.func @transform_1(%arg0: i32, %arg1: memref<16xi32, #tpu.memory_space<smem>>) -> (i32, i32) {
    %c0_i32 = arith.constant 0 : i32
    %c0_i32_0 = arith.constant 0 : i32
    return %arg0, %c0_i32 : i32, i32
  }
}

</mosaic_0001>

<llo_original>
// kernel: tpu_custom_call.1
$region0: #{tpu_custom_call.1}
  #allocation0 [shape = 'u32[]', space=smem, size = 0x4, offset = 0x4, fixed_abs, tag = 'smem constant byte address 0x4 - core index']
  #allocation1 [shape = 'u32[144,128]{1,0:T(1,128)}', space=vmem, size = 0x12000, scoped, tag = 'internal scratch']
  #allocation2 [shape = 'f32[16,128]{1,0:T(8,128)}', space=vmem, size = 0x2000, scoped, tag = 'scratch operand']
  #allocation3 [shape = 's32[1]{0}', space=sflag, size = 0x4, scoped, tag = 'scratch operand']
  #allocation4 [shape = 's32[1]{0}', space=sflag, size = 0x4, scoped, tag = 'scoped memory for tpu_custom_call.1']
  #allocation5 [shape = 'u8[512]{0}', space=smem, size = 0x200, scoped, tag = 'prefetched SMEM operand 0']
  #allocation8 [shape = 's32[]', space=sflag, size = 0x4, offset = 0, fixed_abs, tag = 'sflag constant byte address 0x0 - dummy sync flag']
  #allocation9 [shape = 's32[]', space=sflag, size = 0x4, offset = 0, fixed_abs, tag = 'sflag constant byte address 0x0 - dummy sync flag']
  #allocation10 [shape = 'u32[]', space=smem, size = 0x4, offset = 0x44, fixed_abs, tag = 'smem constant byte address 0x44 - assertion arg 0']
  #allocation11 [shape = 'u32[]', space=smem, size = 0x4, offset = 0x48, fixed_abs, tag = 'smem constant byte address 0x48 - assertion arg 1']
  %s0 = inlined_call_operand.hbm [shape: s32[16], index: 0, kind: input, shape index: {}]
  %s1 = inlined_call_operand.hbm [shape: f32[64,128], index: 1, kind: input, shape index: {}]
  %s2 = inlined_call_operand.hbm [shape: f32[16,128], index: 2, kind: output, shape index: {}]
  %s3 = sld [smem:[#allocation0]]
  $region28: #{tpu_custom_call.1} parent=0
    _
  %s5 = ssub.s32 1, %s3
  %s6 = scalar_select 0, %s5, %s3
  %8 = dma.hbm_to_smem %s0, 16, [#allocation5], [#allocation4]
  %9 = dma.done [#allocation4], 16
  %10 = sfence
  $region1: #{tpu_custom_call.1} parent=0
    #allocation6 [shape = 'u8[8192]{0}', space=vmem, size = 0x2000, scoped, tag = 'output window, operand 0, single buffered']
    #allocation7 [shape = 's32[1]{0}', space=sflag, size = 0x4, scoped, tag = 'scoped memory for tpu_custom_call.1']
    %11 = vsyncpa [#allocation7], 0
    %s12 = smul.u32 0, 16
    loop: start=0, step=1, limit=16
    $region2: #{tpu_custom_call.1} parent=1 // loop_pre_header
      _
    $region3: #{tpu_custom_call.1} parent=1 // loop_header
      %s14 = sphi 0, %s18
      %p15 = scmp.ge.s32.totalorder %s14, 16
    $region4: #{tpu_custom_call.1} parent=1 // loop_header_branch
      %17 = sbr.rel (%p15) target = $region8
    $region5: #{tpu_custom_call.1} parent=1 // loop_body
      %s19 = sadd.s32 %s12, %s14
      %s20 = sld [smem:[#allocation5 + %s19]]
      %s21 = smul.addr %s20, 16
      %s22 = scalar_lea.hbm %s1, %s21
      %s23 = scalar_lea.vmem [#allocation2], %s14
      // Predicated region
      $region9: #{tpu_custom_call.1} parent=5 // pred_check
        _
      $region10: #{tpu_custom_call.1} parent=5 // pred_check_branch
        %25 = sbr.rel target = $region12
      $region11: #{tpu_custom_call.1} parent=5 // pred_region
        %26 = sst [smem:[#allocation10]] [#allocation9]
        %27 = sst [smem:[#allocation11]] [#allocation8]
      $region12: #{tpu_custom_call.1} parent=5 // pred_fallthru
        _
      %29 = shalt.err (0)
      %s31 = sshll.u32 %s23, 4
      %s32 = int_to_ptr.vmem [resolvable:$true] %s31
      %34 = dma.hbm_to_vmem [thread:$0]  %s22, 16, %s32, [#allocation3]
    $region6: #{tpu_custom_call.1} parent=1 // loop_footer
      %s18 = sadd.s32 1, %s14
    $region7: #{tpu_custom_call.1} parent=1 // loop_footer_branch
      %13 = sbr.rel target = $region3
    $region8: #{tpu_custom_call.1} parent=1 // loop_exit
      _
    loop: start=0, step=1, limit=16
    $region13: #{tpu_custom_call.1} parent=1 // loop_pre_header
      _
    $region14: #{tpu_custom_call.1} parent=1 // loop_header
      %s36 = sphi 0, %s40
      %p37 = scmp.ge.s32.totalorder %s36, 16
    $region15: #{tpu_custom_call.1} parent=1 // loop_header_branch
      %39 = sbr.rel (%p37) target = $region19
    $region16: #{tpu_custom_call.1} parent=1 // loop_body
      %s41 = smul.u32 1, 1
      %s42 = sshll.u32 %s41, 4
      %43 = dma.done [#allocation3], %s42
    $region17: #{tpu_custom_call.1} parent=1 // loop_footer
      %s40 = sadd.s32 1, %s36
    $region18: #{tpu_custom_call.1} parent=1 // loop_footer_branch
      %35 = sbr.rel target = $region14
    $region19: #{tpu_custom_call.1} parent=1 // loop_exit
      _
    %v44 = vld [vmem:[#allocation2] sm:$0xff]
    %v45 = vld [vmem:[#allocation2 + $0x8] sm:$0xff]
    %46 = vst [vmem:[#allocation6] sm:$0xff] %v44
    %47 = vst [vmem:[#allocation6 + $0x8] sm:$0xff] %v45
    // Predicated region
    $region20: #{tpu_custom_call.1} parent=1 // pred_check
      _
    $region21: #{tpu_custom_call.1} parent=1 // pred_check_branch
      %49 = sbr.rel (0) target = $region23
    $region22: #{tpu_custom_call.1} parent=1 // pred_region
      %s51 = ssub.s32 256, 256
      %52 = vsyncadd [#allocation7], %s51
      %s53 = sshll.u32 [#allocation6], 4
      %s54 = int_to_ptr.vmem [resolvable:$true] %s53
      %59 = dma.vmem_to_hbm [thread:$0]  %s54, 256, %s2, [#allocation7], 128, 128, 8
    $region23: #{tpu_custom_call.1} parent=1 // pred_fallthru
      _
    // Predicated region
    $region24: #{tpu_custom_call.1} parent=1 // pred_check
      _
    $region25: #{tpu_custom_call.1} parent=1 // pred_check_branch
      %61 = sbr.rel (0) target = $region27
    $region26: #{tpu_custom_call.1} parent=1 // pred_region
      %62 = dma.done [#allocation7], 256
    $region27: #{tpu_custom_call.1} parent=1 // pred_fallthru
      _
    %63 = vsyncpa [#allocation7], 1
  %64 = vsyncmov [#allocation3]
  %s65 = vpop.sfrf %64
  %p66 = scmp.eq.s32.totalorder %s65, 0
  %p67 = pneg %p66
  %69 = shalt.err (%p67)

</llo_original>
